<compile_context>
chip_gen: v5e
topology: v5e:2x2
jax: 0.10.0
libtpu: 0.0.40
codegen_flags: <defaults>
</compile_context>

<pallas_src>
import functools
import math

import numpy as np
import jax
import jax.numpy as jnp
from jax.experimental import pallas as pl
from jax.experimental.pallas import tpu as pltpu

EPS = 1e-5


# ----------------------------------------------------------------------------
# Host-side weight preparation: 3x3 conv -> block-Toeplitz matmul weight.
# ----------------------------------------------------------------------------
def _toeplitz_maps(KH, KW, Cin, Cout, W):
    """Static gather index / mask mapping a (KH,KW,Cin,Cout) kernel into the
    (KH*W*Cin, W*Cout) block-Toeplitz matrix used by the row-im2col matmul.
    Row index = (kh*W + wi)*Cin + ci, col index = wo*Cout + co,
    entry = w[kh, kw=wi-wo+1, ci, co] when 0 <= kw < KW else 0 (horizontal padding)."""
    rows, cols = KH * W * Cin, W * Cout
    idx = np.zeros((rows, cols), np.int32)
    msk = np.zeros((rows, cols), np.float32)
    for kh in range(KH):
        for wi in range(W):
            for ci in range(Cin):
                r = (kh * W + wi) * Cin + ci
                for wo in range(W):
                    kw = wi - wo + 1
                    if 0 <= kw < KW:
                        for co in range(Cout):
                            idx[r, wo * Cout + co] = ((kh * KW + kw) * Cin + ci) * Cout + co
                            msk[r, wo * Cout + co] = 1.0
    return idx, msk


def _make_toeplitz(w_oihw, W, dtype=jnp.bfloat16):
    Cout, Cin, KH, KW = w_oihw.shape
    w_flat = jnp.transpose(w_oihw, (2, 3, 1, 0)).reshape(-1)      # HWIO, flat
    idx, msk = _toeplitz_maps(KH, KW, Cin, Cout, W)
    return (w_flat[idx] * msk).astype(dtype)                      # (KH*W*Cin, W*Cout)


# ----------------------------------------------------------------------------
# In-kernel row-im2col (no scratch, no pad round-trip).
# ----------------------------------------------------------------------------
def _row_im2col(x, H):
    """x: (B*H, L) f32, B whole images stacked along rows.  Returns (B*H, 3*L):
    [row h-1 | row h | row h+1] per output row, with zero halos at per-image
    top/bottom rows.  Shifts use pltpu.roll (XLU); wrapped rows are masked."""
    BH, L = x.shape
    rowmod = jax.lax.broadcasted_iota(jnp.int32, (BH, L), 0) % H
    up = pltpu.roll(x, shift=1, axis=0)           # up[i] = x[i-1]
    up = jnp.where(rowmod == 0, 0.0, up)          # zero halo above each image
    dn = pltpu.roll(x, shift=BH - 1, axis=0)      # dn[i] = x[i+1]
    dn = jnp.where(rowmod == H - 1, 0.0, dn)      # zero halo below each image
    return jnp.concatenate([up, x, dn], axis=1)   # (BH, 3*L)


# ----------------------------------------------------------------------------
# Kernels
# ----------------------------------------------------------------------------
def _conv1_kernel(x_ref, w_ref, y_ref, ssum_ref, ssq_ref, *, H):
    """conv1 as one bf16 MXU matmul over B stacked images + per-step sum/sumsq."""
    patches = _row_im2col(x_ref[...], H).astype(jnp.bfloat16)        # (BH, 3*Lin)
    y = jnp.dot(patches, w_ref[...], preferred_element_type=jnp.float32)
    y_ref[...] = y.astype(y_ref.dtype)                               # bf16 store
    ssum_ref[...] = jnp.sum(y, axis=0, keepdims=True)                # f32 stats
    ssq_ref[...] = jnp.sum(y * y, axis=0, keepdims=True)


def _conv2_kernel(y1_ref, s_ref, t_ref, w_ref, y_ref, ssum_ref, ssq_ref, *, H):
    """bn1 (folded per-lane scale/shift) + relu, conv2 matmul, per-step sum/sumsq."""
    act = jnp.maximum(y1_ref[...].astype(jnp.float32) * s_ref[...] + t_ref[...], 0.0)
    patches = _row_im2col(act, H).astype(jnp.bfloat16)                # (BH, 3*Lout)
    y = jnp.dot(patches, w_ref[...], preferred_element_type=jnp.float32)
    y_ref[...] = y.astype(y_ref.dtype)
    ssum_ref[...] = jnp.sum(y, axis=0, keepdims=True)
    ssq_ref[...] = jnp.sum(y * y, axis=0, keepdims=True)


def _finalize_kernel(y2_ref, x_ref, s_ref, t_ref, o_ref):
    """bn2 + relu, residual identity add, final relu (lane-dense folded layout)."""
    bn2 = jnp.maximum(y2_ref[...].astype(jnp.float32) * s_ref[...] + t_ref[...], 0.0)
    o_ref[...] = jnp.maximum(bn2 + x_ref[...], 0.0)


# ----------------------------------------------------------------------------
# Wrapper helpers
# ----------------------------------------------------------------------------
def _pick_batch_tile(N, H, target_rows=256):
    """Largest divisor B of N with B*H <= target_rows (MXU M-dim fill)."""
    cap = max(1, target_rows // H)
    best = 1
    for d in range(1, N + 1):
        if N % d == 0 and d <= cap:
            best = d
    return best


def _fold_factor(L, total_rows, block_rows):
    """Row-fold factor F so the finalize pass stores F*L lanes (multiple of 128)."""
    if L % 128 == 0:
        return 1
    f = 128 // math.gcd(128, L)
    if total_rows % f == 0 and block_rows % f == 0:
        return f
    return 1


def _vmem_limit(*tile_bytes):
    """Scoped-VMEM request sized from the actual per-step tiles (double-buffered)."""
    total = 2 * sum(tile_bytes)
    return int(min(max(4 * total, 8 * 1024 * 1024), 64 * 1024 * 1024))


def _bn_scale_shift(ssum, ssq, gamma, beta, W, C, count):
    """Training-mode BN (biased variance) folded into a per-channel scale/shift.
    ssum/ssq: (steps, 1, W*C) per-grid-step partials.
    NOTE: E[x^2]-E[x]^2 in f32 with a clamp; fine at these activation scales."""
    s = jnp.sum(ssum, axis=(0, 1)).reshape(W, C).sum(axis=0)
    q = jnp.sum(ssq, axis=(0, 1)).reshape(W, C).sum(axis=0)
    mean = s / count
    var = jnp.maximum(q / count - mean * mean, 0.0)
    scale = gamma * jax.lax.rsqrt(var + EPS)
    shift = beta - mean * scale
    return scale, shift


# ----------------------------------------------------------------------------
# ResidualBlock forward
# ----------------------------------------------------------------------------
def residual_block(x_nchw, w1_oihw, g1, b1, w2_oihw, g2, b2):
    N, Cin, H, W = x_nchw.shape
    Cout = w1_oihw.shape[0]
    assert Cin == Cout, "identity add requires in_channels == out_channels"
    Lin, Lout = W * Cin, W * Cout

    B = _pick_batch_tile(N, H)          # images per grid step (M = B*H matmul rows)
    steps = N // B
    BH = B * H

    # NCHW -> (N*H, W*C): channels-last, W folded onto lanes, rows = image rows.
    x2d = jnp.transpose(x_nchw, (0, 2, 3, 1)).reshape(N * H, Lin).astype(jnp.float32)

    w1t = _make_toeplitz(w1_oihw, W)    # (3*Lin,  Lout) bf16
    w2t = _make_toeplitz(w2_oihw, W)    # (3*Lout, Lout) bf16

    act_in_spec = pl.BlockSpec((BH, Lin), lambda i: (i, 0))
    act_mid_spec = pl.BlockSpec((BH, Lout), lambda i: (i, 0))
    vec_spec = pl.BlockSpec((1, Lout), lambda i: (0, 0))
    stat_spec = pl.BlockSpec((None, 1, Lout), lambda i: (i, 0, 0))
    w1_spec = pl.BlockSpec((3 * Lin, Lout), lambda i: (0, 0))
    w2_spec = pl.BlockSpec((3 * Lout, Lout), lambda i: (0, 0))

    stat_shape = jax.ShapeDtypeStruct((steps, 1, Lout), jnp.float32)

    # ---- Pass 1: conv1 (one bf16 MXU matmul per step) + per-step sum/sumsq. ----
    vmem1 = _vmem_limit(BH * Lin * 4, 3 * Lin * Lout * 2, BH * Lout * 2, 4 * Lout * 4)
    y1, ssum1, ssq1 = pl.pallas_call(
        functools.partial(_conv1_kernel, H=H),
        out_shape=(jax.ShapeDtypeStruct((N * H, Lout), jnp.bfloat16),
                   stat_shape, stat_shape),
        grid_spec=pltpu.PrefetchScalarGridSpec(
            num_scalar_prefetch=0, grid=(steps,),
            in_specs=[act_in_spec, w1_spec],
            out_specs=[act_mid_spec, stat_spec, stat_spec]),
        compiler_params=pltpu.CompilerParams(
            dimension_semantics=("parallel",), vmem_limit_bytes=vmem1),
    )(x2d, w1t)

    sc1, sh1 = _bn_scale_shift(ssum1, ssq1, g1, b1, W, Cout, N * H * W)
    s1 = jnp.tile(sc1, W).reshape(1, Lout)
    t1 = jnp.tile(sh1, W).reshape(1, Lout)

    # ---- Pass 2: bn1+relu (folded) + conv2 + per-step sum/sumsq. ----
    vmem2 = _vmem_limit(BH * Lout * 2, 3 * Lout * Lout * 2, BH * Lout * 2,
                        4 * Lout * 4, 2 * Lout * 4)
    y2, ssum2, ssq2 = pl.pallas_call(
        functools.partial(_conv2_kernel, H=H),
        out_shape=(jax.ShapeDtypeStruct((N * H, Lout), jnp.bfloat16),
                   stat_shape, stat_shape),
        grid_spec=pltpu.PrefetchScalarGridSpec(
            num_scalar_prefetch=0, grid=(steps,),
            in_specs=[act_mid_spec, vec_spec, vec_spec, w2_spec],
            out_specs=[act_mid_spec, stat_spec, stat_spec]),
        compiler_params=pltpu.CompilerParams(
            dimension_semantics=("parallel",), vmem_limit_bytes=vmem2),
    )(y1, s1, t1, w2t)

    sc2, sh2 = _bn_scale_shift(ssum2, ssq2, g2, b2, W, Cout, N * H * W)

    # ---- Pass 3: bn2 + relu + identity add + relu, lane-dense folded layout. ----
    F = _fold_factor(Lout, N * H, BH)           # rows folded onto lanes -> >=128 lanes
    rows = (N * H) // F
    brows = BH // F
    LF = F * Lout
    y2f = y2.reshape(rows, LF)
    xf = x2d.reshape(rows, LF)                  # Lin == Lout here
    s2 = jnp.tile(sc2, F * W).reshape(1, LF)
    t2 = jnp.tile(sh2, F * W).reshape(1, LF)

    vmem3 = _vmem_limit(brows * LF * 2, brows * LF * 4, brows * LF * 4, 2 * LF * 4)
    out_f = pl.pallas_call(
        _finalize_kernel,
        out_shape=jax.ShapeDtypeStruct((rows, LF), jnp.float32),
        grid_spec=pltpu.PrefetchScalarGridSpec(
            num_scalar_prefetch=0, grid=(steps,),
            in_specs=[pl.BlockSpec((brows, LF), lambda i: (i, 0)),
                      pl.BlockSpec((brows, LF), lambda i: (i, 0)),
                      pl.BlockSpec((1, LF), lambda i: (0, 0)),
                      pl.BlockSpec((1, LF), lambda i: (0, 0))],
            out_specs=pl.BlockSpec((brows, LF), lambda i: (i, 0))),
        compiler_params=pltpu.CompilerParams(
            dimension_semantics=("parallel",), vmem_limit_bytes=vmem3),
    )(y2f, xf, s2, t2)

    return jnp.transpose(out_f.reshape(N, H, W, Cout), (0, 3, 1, 2))   # NCHW


# ----------------------------------------------------------------------------
# Pure-JAX reference mirroring the PyTorch forward (training-mode BatchNorm).
# ----------------------------------------------------------------------------
def reference(x_nchw, w1_oihw, g1, b1, w2_oihw, g2, b2):
    def conv(x, w):
        return jax.lax.conv_general_dilated(
            x, w, (1, 1), ((1, 1), (1, 1)),
            dimension_numbers=('NCHW', 'OIHW', 'NCHW'))

    def bn(y, g, b):
        mean = jnp.mean(y, axis=(0, 2, 3), keepdims=True)
        var = jnp.mean((y - mean) ** 2, axis=(0, 2, 3), keepdims=True)
        yh = (y - mean) * jax.lax.rsqrt(var + EPS)
        return yh * g[None, :, None, None] + b[None, :, None, None]

    out = jax.nn.relu(bn(conv(x_nchw, w1_oihw), g1, b1))
    out = jax.nn.relu(bn(conv(out, w2_oihw), g2, b2))
    return jax.nn.relu(out + x_nchw)


if __name__ == "__main__":
    # Small shapes: batch=2, in_channels=out_channels=4, spatial=16, stride=1.
    N, C, H, W = 2, 4, 16, 16
    key = jax.random.PRNGKey(0)
    kx, kw1, kw2, kg1, kb1, kg2, kb2 = jax.random.split(key, 7)

    x = jax.random.normal(kx, (N, C, H, W), jnp.float32)
    w1 = 0.1 * jax.random.normal(kw1, (C, C, 3, 3), jnp.float32)   # conv1 OIHW
    w2 = 0.1 * jax.random.normal(kw2, (C, C, 3, 3), jnp.float32)   # conv2 OIHW
    g1 = 1.0 + 0.1 * jax.random.normal(kg1, (C,), jnp.float32)     # bn1 weight
    b1 = 0.1 * jax.random.normal(kb1, (C,), jnp.float32)           # bn1 bias
    g2 = 1.0 + 0.1 * jax.random.normal(kg2, (C,), jnp.float32)     # bn2 weight
    b2 = 0.1 * jax.random.normal(kb2, (C,), jnp.float32)           # bn2 bias

    out = jax.block_until_ready(residual_block(x, w1, g1, b1, w2, g2, b2))
    ref = jax.block_until_ready(reference(x, w1, g1, b1, w2, g2, b2))

    assert out.shape == (N, C, H, W), out.shape
    err = float(jnp.max(jnp.abs(out - ref)))
    # bf16 MXU operands + bf16-stored y1/y2 intermediates vs pure-f32 reference:
    # expected max error ~1e-2 after two convs + two BN normalizations.
    assert err < 5e-2, err
    print("KERNEL_OK")
</pallas_src>

<mosaic_0001>
module attributes {stable_mosaic.version = 11 : i64} {
  func.func @_conv1_kernel(%arg0: i32, %arg1: memref<32x64xf32, #tpu.memory_space<vmem>>, %arg2: memref<192x64xbf16, #tpu.memory_space<vmem>>, %arg3: memref<32x64xbf16, #tpu.memory_space<vmem>>, %arg4: memref<1x1x64xf32, #tpu.memory_space<vmem>>, %arg5: memref<1x1x64xf32, #tpu.memory_space<vmem>>) attributes {dimension_semantics = [#tpu.dimension_semantics<parallel>], iteration_bounds = array<i64: 1>, scalar_prefetch = 0 : i64, scratch_operands = 0 : i64, tpu.core_type = #tpu.core_type<tc>, window_params = [{transform_indices = @transform_0, window_bounds = array<i64: 32, 64>}, {pipeline_mode = #tpu.pipeline_mode<synchronous>, transform_indices = @transform_1, window_bounds = array<i64: 192, 64>}, {transform_indices = @transform_2, window_bounds = array<i64: 32, 64>}, {transform_indices = @transform_3, window_bounds = array<i64: 1, 1, 64>}, {transform_indices = @transform_4, window_bounds = array<i64: 1, 1, 64>}]} {
    %c0 = arith.constant 0 : index
    %c0_0 = arith.constant 0 : index
    %0 = vector.load %arg1[%c0, %c0_0] : memref<32x64xf32, #tpu.memory_space<vmem>>, vector<32x64xf32>
    %1 = tpu.iota {dimensions = array<i32: 0>} : vector<32x64xi32>
    %c16_i32 = arith.constant 16 : i32
    %c0_i32 = arith.constant 0 : i32
    %2 = arith.cmpi eq, %c16_i32, %c0_i32 : i32
    %c1_i32 = arith.constant 1 : i32
    %3 = arith.select %2, %c1_i32, %c16_i32 : i32
    %4 = vector.broadcast %3 : i32 to vector<32x64xi32>
    %5 = arith.remsi %1, %4 : vector<32x64xi32>
    %c0_i32_1 = arith.constant 0 : i32
    %6 = vector.broadcast %c0_i32_1 : i32 to vector<32x64xi32>
    %7 = arith.cmpi ne, %5, %6 : vector<32x64xi32>
    %c0_i32_2 = arith.constant 0 : i32
    %8 = vector.broadcast %c0_i32_2 : i32 to vector<32x64xi32>
    %9 = arith.cmpi slt, %5, %8 : vector<32x64xi32>
    %c0_i32_3 = arith.constant 0 : i32
    %10 = arith.cmpi slt, %3, %c0_i32_3 : i32
    %11 = vector.broadcast %10 : i1 to vector<32x64xi1>
    %12 = vector.broadcast %11 : vector<32x64xi1> to vector<32x64xi1>
    %13 = arith.xori %9, %12 : vector<32x64xi1>
    %14 = arith.andi %13, %7 : vector<32x64xi1>
    %15 = vector.broadcast %3 : i32 to vector<32x64xi32>
    %16 = arith.addi %5, %15 : vector<32x64xi32>
    %17 = arith.select %14, %16, %5 : vector<32x64xi1>, vector<32x64xi32>
    %c1_i32_4 = arith.constant 1 : i32
    %18 = tpu.dynamic_rotate %0 by %c1_i32_4 dim 0 : vector<32x64xf32>, i32 -> vector<32x64xf32>
    %c0_i32_5 = arith.constant 0 : i32
    %19 = vector.broadcast %c0_i32_5 : i32 to vector<32x64xi32>
    %20 = arith.cmpi eq, %17, %19 : vector<32x64xi32>
    %cst = arith.constant 0.000000e+00 : f32
    %21 = vector.broadcast %cst : f32 to vector<32x64xf32>
    %22 = arith.select %20, %21, %18 : vector<32x64xi1>, vector<32x64xf32>
    %c31_i32 = arith.constant 31 : i32
    %23 = tpu.dynamic_rotate %0 by %c31_i32 dim 0 : vector<32x64xf32>, i32 -> vector<32x64xf32>
    %c15_i32 = arith.constant 15 : i32
    %24 = vector.broadcast %c15_i32 : i32 to vector<32x64xi32>
    %25 = arith.cmpi eq, %17, %24 : vector<32x64xi32>
    %cst_6 = arith.constant 0.000000e+00 : f32
    %26 = vector.broadcast %cst_6 : f32 to vector<32x64xf32>
    %27 = arith.select %25, %26, %23 : vector<32x64xi1>, vector<32x64xf32>
    %28 = tpu.concatenate %22, %0, %27 in 1 : vector<32x64xf32>, vector<32x64xf32>, vector<32x64xf32> -> vector<32x192xf32>
    %29 = arith.truncf %28 : vector<32x192xf32> to vector<32x192xbf16>
    %c0_7 = arith.constant 0 : index
    %c0_8 = arith.constant 0 : index
    %30 = vector.load %arg2[%c0_7, %c0_8] : memref<192x64xbf16, #tpu.memory_space<vmem>>, vector<192x64xbf16>
    %cst_9 = arith.constant dense<0.000000e+00> : vector<32x64xf32>
    %31 = tpu.matmul %29, %30, %cst_9 {dimension_numbers = #tpu.dot_dimension_numbers<[1], [0], [0], [1], [0, 0, 1, 1], [], []>} : vector<32x192xbf16>, vector<192x64xbf16>, vector<32x64xf32> -> vector<32x64xf32>
    %32 = arith.truncf %31 : vector<32x64xf32> to vector<32x64xbf16>
    %c0_10 = arith.constant 0 : index
    %c0_11 = arith.constant 0 : index
    %33 = vector.load %arg3[%c0_10, %c0_11] : memref<32x64xbf16, #tpu.memory_space<vmem>>, vector<32x64xbf16>
    tpu.vector_store %arg3[%c0_10, %c0_11], %32 {strides = array<i32>} : memref<32x64xbf16, #tpu.memory_space<vmem>>, vector<32x64xbf16>,
    %cst_12 = arith.constant dense<0.000000e+00> : vector<64xf32>
    %34 = vector.multi_reduction <add>, %31, %cst_12 [0] : vector<32x64xf32> to vector<64xf32>
    %35 = vector.shape_cast %34 : vector<64xf32> to vector<1x64xf32>
    %c0_13 = arith.constant 0 : index
    %c0_14 = arith.constant 0 : index
    %c0_15 = arith.constant 0 : index
    %36 = vector.load %arg4[%c0_13, %c0_14, %c0_15] : memref<1x1x64xf32, #tpu.memory_space<vmem>>, vector<1x1x64xf32>
    %37 = vector.shape_cast %36 : vector<1x1x64xf32> to vector<1x64xf32>
    %38 = vector.shape_cast %35 : vector<1x64xf32> to vector<1x1x64xf32>
    tpu.vector_store %arg4[%c0_13, %c0_14, %c0_15], %38 {strides = array<i32>} : memref<1x1x64xf32, #tpu.memory_space<vmem>>, vector<1x1x64xf32>,
    %39 = arith.mulf %31, %31 : vector<32x64xf32>
    %cst_16 = arith.constant dense<0.000000e+00> : vector<64xf32>
    %40 = vector.multi_reduction <add>, %39, %cst_16 [0] : vector<32x64xf32> to vector<64xf32>
    %41 = vector.shape_cast %40 : vector<64xf32> to vector<1x64xf32>
    %c0_17 = arith.constant 0 : index
    %c0_18 = arith.constant 0 : index
    %c0_19 = arith.constant 0 : index
    %42 = vector.load %arg5[%c0_17, %c0_18, %c0_19] : memref<1x1x64xf32, #tpu.memory_space<vmem>>, vector<1x1x64xf32>
    %43 = vector.shape_cast %42 : vector<1x1x64xf32> to vector<1x64xf32>
    %44 = vector.shape_cast %41 : vector<1x64xf32> to vector<1x1x64xf32>
    tpu.vector_store %arg5[%c0_17, %c0_18, %c0_19], %44 {strides = array<i32>} : memref<1x1x64xf32, #tpu.memory_space<vmem>>, vector<1x1x64xf32>,
    return
  }
  func.func @transform_0(%arg0: i32) -> (i32, i32) {
    %c0_i32 = arith.constant 0 : i32
    %c0_i32_0 = arith.constant 0 : i32
    return %arg0, %c0_i32 : i32, i32
  }
  func.func @transform_1(%arg0: i32) -> (i32, i32) {
    %c0_i32 = arith.constant 0 : i32
    %c0_i32_0 = arith.constant 0 : i32
    %c0_i32_1 = arith.constant 0 : i32
    return %c0_i32, %c0_i32_0 : i32, i32
  }
  func.func @transform_2(%arg0: i32) -> (i32, i32) {
    %c0_i32 = arith.constant 0 : i32
    %c0_i32_0 = arith.constant 0 : i32
    return %arg0, %c0_i32 : i32, i32
  }
  func.func @transform_3(%arg0: i32) -> (i32, i32, i32) {
    %c0_i32 = arith.constant 0 : i32
    %c0_i32_0 = arith.constant 0 : i32
    %c0_i32_1 = arith.constant 0 : i32
    return %arg0, %c0_i32, %c0_i32_0 : i32, i32, i32
  }
  func.func @transform_4(%arg0: i32) -> (i32, i32, i32) {
    %c0_i32 = arith.constant 0 : i32
    %c0_i32_0 = arith.constant 0 : i32
    %c0_i32_1 = arith.constant 0 : i32
    return %arg0, %c0_i32, %c0_i32_0 : i32, i32, i32
  }
}

</mosaic_0001>

<llo_original>
// kernel: tpu_custom_call.1
$region0: #{tpu_custom_call.1}
  #allocation0 [shape = 'u32[]', space=smem, size = 0x4, offset = 0x4, fixed_abs, tag = 'smem constant byte address 0x4 - core index']
  #allocation1 [shape = 'u32[72,128]{1,0:T(1,128)}', space=vmem, size = 0x9000, scoped, tag = 'internal scratch']
  %s0 = inlined_call_operand.vmem [shape: f32[32,64], index: 0, kind: input, shape index: {}]
  %s1 = inlined_call_operand.vmem [shape: bf16[192,64], index: 1, kind: input, shape index: {}]
  %s2 = inlined_call_operand.hbm [shape: bf16[32,64], index: 2, kind: output, shape index: {0}]
  %s3 = inlined_call_operand.hbm [shape: f32[1,1,64], index: 3, kind: output, shape index: {1}]
  %s4 = inlined_call_operand.hbm [shape: f32[1,1,64], index: 4, kind: output, shape index: {2}]
  %5 = xla_tuple %s2, %s3, %s4
  %s6 = sld [smem:[#allocation0]]
  $region34: #{tpu_custom_call.1} parent=0
    _
  %s8 = ssub.s32 1, %s6
  %s9 = scalar_select 0, %s8, %s6
  $region1: #{tpu_custom_call.1} parent=0
    #allocation2 [shape = 'u8[8192]{0}', space=vmem, size = 0x2000, scoped, tag = 'output window, operand 0, single buffered']
    #allocation3 [shape = 's32[1]{0}', space=sflag, size = 0x4, scoped, tag = 'scoped memory for tpu_custom_call.1']
    #allocation4 [shape = 'u8[512]{0}', space=vmem, size = 0x400, scoped, tag = 'output window, operand 1, single buffered']
    #allocation5 [shape = 's32[1]{0}', space=sflag, size = 0x4, scoped, tag = 'scoped memory for tpu_custom_call.1']
    #allocation6 [shape = 'u8[512]{0}', space=vmem, size = 0x400, scoped, tag = 'output window, operand 2, single buffered']
    %10 = vsyncpa [#allocation3], 0
    %11 = vsyncpa [#allocation5], 0
    // Predicated region
    $region2: #{tpu_custom_call.1} parent=1 // pred_check
      _
    $region3: #{tpu_custom_call.1} parent=1 // pred_check_branch
      %13 = sbr.rel (0) target = $region5
    $region4: #{tpu_custom_call.1} parent=1 // pred_region
      _
    $region5: #{tpu_custom_call.1} parent=1 // pred_fallthru
      _
    // Predicated region
    $region6: #{tpu_custom_call.1} parent=1 // pred_check
      _
    $region7: #{tpu_custom_call.1} parent=1 // pred_check_branch
      %15 = sbr.rel (0) target = $region9
    $region8: #{tpu_custom_call.1} parent=1 // pred_region
      _
    $region9: #{tpu_custom_call.1} parent=1 // pred_fallthru
      _
    %v17 = vld [vmem:[%s0] sm:$0xff]
    %v18 = vld [vmem:[%s0 + $0x8] sm:$0xff]
    %v19 = vld [vmem:[%s0 + $0x10] sm:$0xff]
    %v20 = vld [vmem:[%s0 + $0x18] sm:$0xff]
    %v21 = vlaneseq
    %v22 = vshrl.u32 %v21, 7
    %v23 = vadd.s32 %v22, 8
    %v24 = vadd.s32 %v22, 16
    %v25 = vadd.s32 %v22, 24
    %vm26 = vcmp.lt.s32.totalorder %v22, 0
    %v27 = vsub.s32 0, %v22
    %v28 = vsel %vm26, %v27, %v22
    %v29 = vshrl.u32 %v28, 4
    %v30 = vand.u32 %v28, 15
    %v31 = vsub.s32 0, %v30
    %v32 = vsel %vm26, %v31, %v30
    %vm33 = vcmp.lt.s32.totalorder %v23, 0
    %v34 = vsub.s32 0, %v23
    %v35 = vsel %vm33, %v34, %v23
    %v36 = vshrl.u32 %v35, 4
    %v37 = vand.u32 %v35, 15
    %v38 = vsub.s32 0, %v37
    %v39 = vsel %vm33, %v38, %v37
    %vm40 = vcmp.lt.s32.totalorder %v24, 0
    %v41 = vsub.s32 0, %v24
    %v42 = vsel %vm40, %v41, %v24
    %v43 = vshrl.u32 %v42, 4
    %v44 = vand.u32 %v42, 15
    %v45 = vsub.s32 0, %v44
    %v46 = vsel %vm40, %v45, %v44
    %vm47 = vcmp.lt.s32.totalorder %v25, 0
    %v48 = vsub.s32 0, %v25
    %v49 = vsel %vm47, %v48, %v25
    %v50 = vshrl.u32 %v49, 4
    %v51 = vand.u32 %v49, 15
    %v52 = vsub.s32 0, %v51
    %v53 = vsel %vm47, %v52, %v51
    %vm54 = vcmp.ne.s32.totalorder %v32, 0
    %vm55 = vcmp.ne.s32.totalorder %v39, 0
    %vm56 = vcmp.ne.s32.totalorder %v46, 0
    %vm57 = vcmp.ne.s32.totalorder %v53, 0
    %vm58 = vcmp.lt.s32.totalorder %v32, 0
    %vm59 = vcmp.lt.s32.totalorder %v39, 0
    %vm60 = vcmp.lt.s32.totalorder %v46, 0
    %vm61 = vcmp.lt.s32.totalorder %v53, 0
    %vm62 = vmand %vm58, %vm54
    %vm63 = vmand %vm59, %vm55
    %vm64 = vmand %vm60, %vm56
    %vm65 = vmand %vm61, %vm57
    %v66 = vadd.s32 %v32, 16
    %v67 = vadd.s32 %v39, 16
    %v68 = vadd.s32 %v46, 16
    %v69 = vadd.s32 %v53, 16
    %v70 = vsel %vm62, %v66, %v32
    %v71 = vsel %vm63, %v67, %v39
    %v72 = vsel %vm64, %v68, %v46
    %v73 = vsel %vm65, %v69, %v53
    %v74 = vrot.slane %v17, 7
    %v75 = vrot.slane %v18, 7
    %v76 = vrot.slane %v19, 7
    %v77 = vrot.slane %v20, 7
    %vm78 = vcmp.lt.s32.totalorder %v22, 1
    %v79 = vsel %vm78, %v76, %v77
    %v80 = vsel %vm78, %v75, %v76
    %v81 = vsel %vm78, %v74, %v75
    %v82 = vsel %vm78, %v77, %v74
    %vm83 = vcmp.eq.s32.totalorder %v70, 0
    %vm84 = vcmp.eq.s32.totalorder %v71, 0
    %vm85 = vcmp.eq.s32.totalorder %v72, 0
    %vm86 = vcmp.eq.s32.totalorder %v73, 0
    %v87 = vsel %vm83, 0.0, %v82
    %v88 = vsel %vm84, 0.0, %v81
    %v89 = vsel %vm85, 0.0, %v80
    %v90 = vsel %vm86, 0.0, %v79
    %v91 = vrot.slane %v17, 1
    %v92 = vrot.slane %v18, 1
    %v93 = vrot.slane %v19, 1
    %v94 = vrot.slane %v20, 1
    %vm95 = vcmp.lt.s32.totalorder %v22, 7
    %v96 = vsel %vm95, %v93, %v94
    %v97 = vsel %vm95, %v92, %v93
    %v98 = vsel %vm95, %v91, %v92
    %v99 = vsel %vm95, %v94, %v91
    %vm100 = vcmp.eq.s32.totalorder %v70, 15
    %vm101 = vcmp.eq.s32.totalorder %v71, 15
    %vm102 = vcmp.eq.s32.totalorder %v72, 15
    %vm103 = vcmp.eq.s32.totalorder %v73, 15
    %v104 = vsel %vm100, 0.0, %v98
    %v105 = vsel %vm101, 0.0, %v97
    %v106 = vsel %vm102, 0.0, %v96
    %v107 = vsel %vm103, 0.0, %v99
    %112 = vrot.lane.b32.xlu0 %v17, 64
    %v113 = vpop.permute.xlu0 %112
    %114 = vrot.lane.b32.xlu0 %v18, 64
    %v115 = vpop.permute.xlu0 %114
    %116 = vrot.lane.b32.xlu0 %v19, 64
    %v117 = vpop.permute.xlu0 %116
    %118 = vrot.lane.b32.xlu0 %v20, 64
    %v119 = vpop.permute.xlu0 %118
    %vm124 = vcmask 523264
    %v125 = vsel %vm124, %v87, %v113
    %v126 = vsel %vm124, %v88, %v115
    %v127 = vsel %vm124, %v89, %v117
    %v128 = vsel %vm124, %v90, %v119
    %v129 = vpack.c.bf16 %v126, %v125
    %v130 = vpack.c.bf16 %v105, %v104
    %v131 = vpack.c.bf16 %v128, %v127
    %v132 = vpack.c.bf16 %v107, %v106
    %v133 = vld [vmem:[%s1] sm:$0xf]
    %v134 = vld [vmem:[%s1 + $0x4] sm:$0xf]
    %v135 = vld [vmem:[%s1 + $0x8] sm:$0xf]
    %v136 = vld [vmem:[%s1 + $0xc] sm:$0xf]
    %v137 = vld [vmem:[%s1 + $0x10] sm:$0xf]
    %v138 = vld [vmem:[%s1 + $0x14] sm:$0xf]
    %v139 = vld [vmem:[%s1 + $0x18] sm:$0xf]
    %v140 = vld [vmem:[%s1 + $0x1c] sm:$0xf]
    %v141 = vld [vmem:[%s1 + $0x20] sm:$0xf]
    %v142 = vld [vmem:[%s1 + $0x24] sm:$0xf]
    %v143 = vld [vmem:[%s1 + $0x28] sm:$0xf]
    %v144 = vld [vmem:[%s1 + $0x2c] sm:$0xf]
    %v145 = vld [vmem:[%s1 + $0x30] sm:$0xf]
    %v146 = vld [vmem:[%s1 + $0x34] sm:$0xf]
    %v147 = vld [vmem:[%s1 + $0x38] sm:$0xf]
    %v148 = vld [vmem:[%s1 + $0x3c] sm:$0xf]
    %v149 = vld [vmem:[%s1 + $0x40] sm:$0xf]
    %v150 = vld [vmem:[%s1 + $0x44] sm:$0xf]
    %v151 = vld [vmem:[%s1 + $0x48] sm:$0xf]
    %v152 = vld [vmem:[%s1 + $0x4c] sm:$0xf]
    %v153 = vld [vmem:[%s1 + $0x50] sm:$0xf]
    %v154 = vld [vmem:[%s1 + $0x54] sm:$0xf]
    %v155 = vld [vmem:[%s1 + $0x58] sm:$0xf]
    %v156 = vld [vmem:[%s1 + $0x5c] sm:$0xf]
    %v181 = vunpack.c.l.b16 %v133
    %v182 = vunpack.c.l.b16 %v134
    %v183 = vunpack.c.l.b16 %v135
    %v184 = vunpack.c.l.b16 %v136
    %v185 = vunpack.c.l.b16 %v137
    %v186 = vunpack.c.l.b16 %v138
    %v187 = vunpack.c.l.b16 %v139
    %v188 = vunpack.c.l.b16 %v140
    %v189 = vunpack.c.l.b16 %v141
    %v190 = vunpack.c.l.b16 %v142
    %v191 = vunpack.c.l.b16 %v143
    %v192 = vunpack.c.l.b16 %v144
    %v193 = vunpack.c.l.b16 %v145
    %v194 = vunpack.c.l.b16 %v146
    %v195 = vunpack.c.l.b16 %v147
    %v196 = vunpack.c.l.b16 %v148
    %v197 = vunpack.c.l.b16 %v149
    %v198 = vunpack.c.l.b16 %v150
    %v199 = vunpack.c.l.b16 %v151
    %v200 = vunpack.c.l.b16 %v152
    %v201 = vunpack.c.l.b16 %v153
    %v202 = vunpack.c.l.b16 %v154
    %v203 = vunpack.c.l.b16 %v155
    %v204 = vunpack.c.l.b16 %v156
    %v205 = vpack.c.b16 %v182, %v181
    %v206 = vpack.c.b16 %v184, %v183
    %v207 = vpack.c.b16 %v186, %v185
    %v208 = vpack.c.b16 %v188, %v187
    %v209 = vpack.c.b16 %v190, %v189
    %v210 = vpack.c.b16 %v192, %v191
    %v211 = vpack.c.b16 %v194, %v193
    %v212 = vpack.c.b16 %v196, %v195
    %v213 = vpack.c.b16 %v198, %v197
    %v214 = vpack.c.b16 %v200, %v199
    %v215 = vpack.c.b16 %v202, %v201
    %v216 = vpack.c.b16 %v204, %v203
    %v230 = vsel %vm124, %v130, 0
    %v233 = vsel %vm124, %v132, 0
    %235 = vmatpush.bf16.msra.mxu0 %v212
    %236 = vmatpush.bf16.msra.mxu0 %v211
    %237 = vmatpush.bf16.msra.mxu0 %v210
    %238 = vmatpush.bf16.msra.mxu0 %v209
    %239 = vmatpush.bf16.msra.mxu0 %v208
    %240 = vmatpush.bf16.msra.mxu0 %v207
    %241 = vmatpush.bf16.msra.mxu0 %v206
    %242 = vmatpush.bf16.msra.mxu0 %v205
    %243 = vmatmul.bf16.gmra.mxu0 %v129
    %v244 = vpop.f32.mrf.mxu0
    %v245 = vadd.f32 0.0, %v244
    %v246 = vpop.f32.mrf.mxu0
    %v247 = vadd.f32 0.0, %v246
    %248 = vmatmul.bf16.gmra.mxu0 %v131
    %v249 = vpop.f32.mrf.mxu0
    %v250 = vadd.f32 0.0, %v249
    %v251 = vpop.f32.mrf.mxu0
    %v252 = vadd.f32 0.0, %v251
    %253 = vdwg.mxu0
    %254 = vmatpush.bf16.msra.mxu0 0
    %255 = vmatpush.bf16.msra.mxu0 0
    %256 = vmatpush.bf16.msra.mxu0 0
    %257 = vmatpush.bf16.msra.mxu0 0
    %258 = vmatpush.bf16.msra.mxu0 %v216
    %259 = vmatpush.bf16.msra.mxu0 %v215
    %260 = vmatpush.bf16.msra.mxu0 %v214
    %261 = vmatpush.bf16.msra.mxu0 %v213
    %262 = vmatmul.bf16.gmra.mxu0 %v230
    %v263 = vpop.f32.mrf.mxu0
    %v264 = vadd.f32 %v245, %v263
    %v265 = vpop.f32.mrf.mxu0
    %v266 = vadd.f32 %v247, %v265
    %267 = vmatmul.bf16.gmra.mxu0 %v233
    %v268 = vpop.f32.mrf.mxu0
    %v269 = vadd.f32 %v250, %v268
    %v270 = vpop.f32.mrf.mxu0
    %v271 = vadd.f32 %v252, %v270
    %272 = vdwg.mxu0
    %v273 = vpack.c.bf16 %v264, %v264
    %v274 = vpack.c.bf16 %v266, %v266
    %v275 = vpack.c.bf16 %v269, %v269
    %v276 = vpack.c.bf16 %v271, %v271
    %vm277 = vcmask 519168
    %278 = vst.msk [vmem:[#allocation2] sm:$0xf] %vm277, %v273
    %279 = vst.msk [vmem:[#allocation2 + $0x4] sm:$0xf] %vm277, %v274
    %280 = vst.msk [vmem:[#allocation2 + $0x8] sm:$0xf] %vm277, %v275
    %281 = vst.msk [vmem:[#allocation2 + $0xc] sm:$0xf] %vm277, %v276
    %v282 = vsel %vm124, %v264, 0.0
    %v283 = vsel %vm124, %v266, 0.0
    %v284 = vadd.f32 %v282, %v283
    %v285 = vsel %vm124, %v269, 0.0
    %v286 = vadd.f32 %v284, %v285
    %v287 = vsel %vm124, %v271, 0.0
    %v288 = vadd.f32 %v286, %v287
    %v289 = vrot.slane %v288, 4
    %v290 = vadd.f32 %v288, %v289
    %v291 = vrot.slane %v290, 2
    %v292 = vadd.f32 %v290, %v291
    %v293 = vrot.slane %v292, 1
    %v294 = vadd.f32 %v292, %v293
    %vm295 = vcmask 516096
    %296 = vst.msk [vmem:[#allocation4] sm:$0x1] %vm295, %v294
    %v297 = vmul.f32 %v264, %v264
    %v298 = vmul.f32 %v266, %v266
    %v299 = vmul.f32 %v269, %v269
    %v300 = vmul.f32 %v271, %v271
    %v301 = vsel %vm124, %v297, 0.0
    %v302 = vsel %vm124, %v298, 0.0
    %v303 = vadd.f32 %v301, %v302
    %v304 = vsel %vm124, %v299, 0.0
    %v305 = vadd.f32 %v303, %v304
    %v306 = vsel %vm124, %v300, 0.0
    %v307 = vadd.f32 %v305, %v306
    %v308 = vrot.slane %v307, 4
    %v309 = vadd.f32 %v307, %v308
    %v310 = vrot.slane %v309, 2
    %v311 = vadd.f32 %v309, %v310
    %v312 = vrot.slane %v311, 1
    %v313 = vadd.f32 %v311, %v312
    %314 = vst.msk [vmem:[#allocation6] sm:$0x1] %vm295, %v313
    // Predicated region
    $region10: #{tpu_custom_call.1} parent=1 // pred_check
      _
    $region11: #{tpu_custom_call.1} parent=1 // pred_check_branch
      %316 = sbr.rel (0) target = $region13
    $region12: #{tpu_custom_call.1} parent=1 // pred_region
      %318 = vsyncadd [#allocation3], 0
      %s319 = sshll.u32 [#allocation2], 4
      %s320 = int_to_ptr.vmem [resolvable:$true] %s319
      %s321 = sshll.u32 %s2, 4
      %s322 = int_to_ptr.hbm [resolvable:$true] %s321
      %327 = dma.vmem_to_hbm [thread:$0]  %s320, 256, %s322, [#allocation3], 64, 64, 4
    $region13: #{tpu_custom_call.1} parent=1 // pred_fallthru
      _
    // Predicated region
    $region14: #{tpu_custom_call.1} parent=1 // pred_check
      _
    $region15: #{tpu_custom_call.1} parent=1 // pred_check_branch
      %329 = sbr.rel (0) target = $region17
    $region16: #{tpu_custom_call.1} parent=1 // pred_region
      %331 = vsyncadd [#allocation5], 0
      %s333 = sshll.u32 [#allocation4], 4
      %s334 = int_to_ptr.vmem [resolvable:$true] %s333
      %s335 = sshll.u32 %s3, 4
      %s336 = int_to_ptr.hbm [resolvable:$true] %s335
      %338 = dma.vmem_to_hbm [thread:$0]  %s334, 16, %s336, [#allocation5]
    $region17: #{tpu_custom_call.1} parent=1 // pred_fallthru
      _
    // Predicated region
    $region18: #{tpu_custom_call.1} parent=1 // pred_check
      _
    $region19: #{tpu_custom_call.1} parent=1 // pred_check_branch
      %340 = sbr.rel (0) target = $region21
    $region20: #{tpu_custom_call.1} parent=1 // pred_region
      %342 = vsyncadd [#allocation5], 0
      %s344 = sshll.u32 [#allocation6], 4
      %s345 = int_to_ptr.vmem [resolvable:$true] %s344
      %s346 = sshll.u32 %s4, 4
      %s347 = int_to_ptr.hbm [resolvable:$true] %s346
      %349 = dma.vmem_to_hbm [thread:$0]  %s345, 16, %s347, [#allocation5]
    $region21: #{tpu_custom_call.1} parent=1 // pred_fallthru
      _
    // Predicated region
    $region22: #{tpu_custom_call.1} parent=1 // pred_check
      _
    $region23: #{tpu_custom_call.1} parent=1 // pred_check_branch
      %351 = sbr.rel (0) target = $region25
    $region24: #{tpu_custom_call.1} parent=1 // pred_region
      %353 = dma.done [#allocation3], 256
    $region25: #{tpu_custom_call.1} parent=1 // pred_fallthru
      _
    // Predicated region
    $region26: #{tpu_custom_call.1} parent=1 // pred_check
      _
    $region27: #{tpu_custom_call.1} parent=1 // pred_check_branch
      %355 = sbr.rel (0) target = $region29
    $region28: #{tpu_custom_call.1} parent=1 // pred_region
      %357 = dma.done [#allocation5], 16
    $region29: #{tpu_custom_call.1} parent=1 // pred_fallthru
      _
    // Predicated region
    $region30: #{tpu_custom_call.1} parent=1 // pred_check
      _
    $region31: #{tpu_custom_call.1} parent=1 // pred_check_branch
      %359 = sbr.rel (0) target = $region33
    $region32: #{tpu_custom_call.1} parent=1 // pred_region
      %361 = dma.done [#allocation5], 16
    $region33: #{tpu_custom_call.1} parent=1 // pred_fallthru
      _
    %362 = vsyncpa [#allocation3], 1
    %363 = vsyncpa [#allocation5], 1

</llo_original>
